<compile_context>
chip_gen: v7x
topology: tpu7x:2x2x1
jax: 0.10.0
libtpu: 0.0.40
codegen_flags: <defaults>
</compile_context>

<pallas_src>
import functools

import jax
import jax.numpy as jnp
from jax.experimental import pallas as pl
from jax.experimental.pallas import tpu as pltpu


def _rmsnorm_kernel(x_ref, w_ref, o_ref, *, eps, inv_dim):
    # x_ref: (row_tile, dim_padded); w_ref: (1, dim_padded) already f32.
    x = x_ref[...]
    xf = x.astype(jnp.float32)
    # Sum-of-squares reduction in f32; padded lanes are zero so they contribute
    # nothing. Fold 1/dim (true dim) into the rsqrt argument so the mean costs
    # no extra full-tile vector op.
    ss = jnp.sum(xf * xf, axis=-1, keepdims=True)          # (row_tile, 1) f32
    inv = jax.lax.rsqrt(ss * inv_dim + eps)                 # per-row rsqrt (EUP)
    # Broadcast multiplies only (no full-tile divide).
    y = xf * w_ref[...] * inv
    o_ref[...] = y.astype(o_ref.dtype)


def _round_up(n, m):
    return ((n + m - 1) // m) * m


def _pick_row_tile(rows, dim_padded):
    # Budget ~32 MiB for the 4 pipelined data buffers (input + output, each
    # double-buffered), counted at f32 width (worst case once the in-kernel
    # upcast is included). This leaves headroom under v7x's 64 MiB physical
    # VMEM and is far below the 128 MiB on v5e/v6e.
    budget = 32 * 1024 * 1024
    per_row = 4 * dim_padded * 4
    max_rows = max(8, budget // per_row)
    row_tile = int(min(512, max_rows))
    if row_tile >= 16:
        row_tile = (row_tile // 16) * 16   # multiple of 16: keeps bf16 sublane packing
    else:
        row_tile = 8
    # Don't make the tile bigger than the (padded) problem.
    rows_cap = _round_up(rows, 16) if rows > 8 else 8
    return max(8, min(row_tile, rows_cap))


def rmsnorm(x, weight, eps=1e-5):
    """x: (..., dim) float array; weight: (dim,). Matches torch: x*w/sqrt(mean(x^2)+eps)."""
    orig_shape = x.shape
    dim = orig_shape[-1]
    x2d = x.reshape(-1, dim)
    rows = x2d.shape[0]

    # Lane-dense output: pad the normalization axis to a multiple of 128.
    # Padded lanes are zero and do not affect the sum-of-squares (the mean
    # uses the true `dim`); the padded weight lanes are zero too.
    dim_padded = max(128, _round_up(dim, 128))
    row_tile = _pick_row_tile(rows, dim_padded)
    rows_padded = _round_up(rows, row_tile)   # cdiv grid via zero padding; no hard assert

    xp = x2d
    if dim_padded != dim or rows_padded != rows:
        xp = jnp.pad(x2d, ((0, rows_padded - rows), (0, dim_padded - dim)))

    # Hoist the weight cast (f32) out of the kernel body.
    wp = jnp.pad(weight.astype(jnp.float32), (0, dim_padded - dim)).reshape(1, dim_padded)

    grid = (rows_padded // row_tile,)

    # Raise the scoped-VMEM limit to actually fit the enlarged tile:
    # in + out tiles double-buffered at f32 width, plus the weight block.
    buf_bytes = 4 * row_tile * dim_padded * 4 + 4 * dim_padded * 4
    vmem_limit = int(max(32 * 1024 * 1024, min(48 * 1024 * 1024, int(buf_bytes * 1.5))))

    kernel = functools.partial(_rmsnorm_kernel, eps=float(eps), inv_dim=1.0 / float(dim))

    out = pl.pallas_call(
        kernel,
        out_shape=jax.ShapeDtypeStruct((rows_padded, dim_padded), x.dtype),
        grid_spec=pltpu.PrefetchScalarGridSpec(
            num_scalar_prefetch=0,
            grid=grid,
            in_specs=[
                pl.BlockSpec((row_tile, dim_padded), lambda i: (i, 0)),
                pl.BlockSpec((1, dim_padded), lambda i: (0, 0)),
            ],
            out_specs=pl.BlockSpec((row_tile, dim_padded), lambda i: (i, 0)),
        ),
        compiler_params=pltpu.CompilerParams(
            dimension_semantics=("parallel",),
            vmem_limit_bytes=vmem_limit,
        ),
    )(xp, wp)

    out = out[:rows, :dim]
    return out.reshape(orig_shape)


def rmsnorm_ref(x, weight, eps=1e-5):
    norm = jnp.sqrt(jnp.mean(x.astype(jnp.float32) ** 2, axis=-1, keepdims=True) + eps)
    return (x * weight / norm).astype(x.dtype)


if __name__ == "__main__":
    key = jax.random.PRNGKey(0)

    # Small shapes consistent with the module's forward (batch, seq, hidden).
    batch, seq, hidden = 2, 8, 32
    x = jax.random.normal(key, (batch, seq, hidden), dtype=jnp.float32)
    # Deterministic parameter init: nn.Parameter(torch.ones(dim))
    weight = jnp.ones((hidden,), dtype=jnp.float32)

    y = rmsnorm(x, weight, eps=1e-5)
    y = jax.block_until_ready(y)
    y_ref = rmsnorm_ref(x, weight, eps=1e-5)
    assert y.shape == x.shape and y.dtype == x.dtype
    assert jnp.allclose(y, y_ref, atol=1e-5, rtol=1e-5)

    # Also validate a lane-dense production-like dim (multiple of 128) with
    # rows that are not a multiple of the row tile, exercising the padded path.
    key2 = jax.random.PRNGKey(0)
    x2 = jax.random.normal(key2, (3, 7, 256), dtype=jnp.float32)
    w2 = jnp.ones((256,), dtype=jnp.float32)
    y2 = jax.block_until_ready(rmsnorm(x2, w2, eps=1e-5))
    assert jnp.allclose(y2, rmsnorm_ref(x2, w2, eps=1e-5), atol=1e-5, rtol=1e-5)

    print("KERNEL_OK")
</pallas_src>

<mosaic_0001>
module attributes {stable_mosaic.version = 11 : i64} {
  func.func @_rmsnorm_kernel(%arg0: i32, %arg1: memref<16x128xf32, #tpu.memory_space<vmem>>, %arg2: memref<1x128xf32, #tpu.memory_space<vmem>>, %arg3: memref<16x128xf32, #tpu.memory_space<vmem>>) attributes {dimension_semantics = [#tpu.dimension_semantics<parallel>], iteration_bounds = array<i64: 1>, scalar_prefetch = 0 : i64, scratch_operands = 0 : i64, tpu.core_type = #tpu.core_type<tc>, window_params = [{transform_indices = @transform_0, window_bounds = array<i64: 16, 128>}, {pipeline_mode = #tpu.pipeline_mode<synchronous>, transform_indices = @transform_1, window_bounds = array<i64: 1, 128>}, {transform_indices = @transform_2, window_bounds = array<i64: 16, 128>}]} {
    %c0 = arith.constant 0 : index
    %c0_0 = arith.constant 0 : index
    %0 = vector.load %arg1[%c0, %c0_0] : memref<16x128xf32, #tpu.memory_space<vmem>>, vector<16x128xf32>
    %1 = arith.mulf %0, %0 : vector<16x128xf32>
    %cst = arith.constant dense<0.000000e+00> : vector<16xf32>
    %2 = vector.multi_reduction <add>, %1, %cst [1] : vector<16x128xf32> to vector<16xf32>
    %3 = vector.shape_cast %2 : vector<16xf32> to vector<16x1xf32>
    %cst_1 = arith.constant 3.125000e-02 : f32
    %4 = vector.broadcast %cst_1 : f32 to vector<16x1xf32>
    %5 = arith.mulf %3, %4 : vector<16x1xf32>
    %cst_2 = arith.constant 9.99999974E-6 : f32
    %6 = vector.broadcast %cst_2 : f32 to vector<16x1xf32>
    %7 = arith.addf %5, %6 : vector<16x1xf32>
    %8 = math.rsqrt %7 : vector<16x1xf32>
    %c0_3 = arith.constant 0 : index
    %c0_4 = arith.constant 0 : index
    %9 = vector.load %arg2[%c0_3, %c0_4] : memref<1x128xf32, #tpu.memory_space<vmem>>, vector<1x128xf32>
    %10 = vector.broadcast %9 : vector<1x128xf32> to vector<16x128xf32>
    %11 = arith.mulf %0, %10 : vector<16x128xf32>
    %12 = vector.broadcast %8 : vector<16x1xf32> to vector<16x128xf32>
    %13 = arith.mulf %11, %12 : vector<16x128xf32>
    %c0_5 = arith.constant 0 : index
    %c0_6 = arith.constant 0 : index
    %14 = vector.load %arg3[%c0_5, %c0_6] : memref<16x128xf32, #tpu.memory_space<vmem>>, vector<16x128xf32>
    tpu.vector_store %arg3[%c0_5, %c0_6], %13 {strides = array<i32>} : memref<16x128xf32, #tpu.memory_space<vmem>>, vector<16x128xf32>,
    return
  }
  func.func @transform_0(%arg0: i32) -> (i32, i32) {
    %c0_i32 = arith.constant 0 : i32
    %c0_i32_0 = arith.constant 0 : i32
    return %arg0, %c0_i32 : i32, i32
  }
  func.func @transform_1(%arg0: i32) -> (i32, i32) {
    %c0_i32 = arith.constant 0 : i32
    %c0_i32_0 = arith.constant 0 : i32
    %c0_i32_1 = arith.constant 0 : i32
    return %c0_i32, %c0_i32_0 : i32, i32
  }
  func.func @transform_2(%arg0: i32) -> (i32, i32) {
    %c0_i32 = arith.constant 0 : i32
    %c0_i32_0 = arith.constant 0 : i32
    return %arg0, %c0_i32 : i32, i32
  }
}

</mosaic_0001>

<llo_original>
// kernel: tpu_custom_call.1
$region0: #{tpu_custom_call.1}
  #allocation0 [shape = 'u32[]', space=smem, size = 0x4, offset = 0x4, fixed_abs, tag = 'smem constant byte address 0x4 - core index']
  #allocation1 [shape = 'u32[144,128]{1,0:T(1,128)}', space=vmem, size = 0x12000, scoped, tag = 'internal scratch']
  %s0 = inlined_call_operand.hbm [shape: f32[16,128], index: 0, kind: input, shape index: {}]
  %s1 = inlined_call_operand.vmem [shape: f32[1,128], index: 1, kind: input, shape index: {}]
  %s2 = inlined_call_operand.hbm [shape: f32[16,128], index: 2, kind: output, shape index: {}]
  %s3 = sld [smem:[#allocation0]]
  $region22: #{tpu_custom_call.1} parent=0
    _
  %s5 = ssub.s32 1, %s3
  %s6 = scalar_select 0, %s5, %s3
  $region1: #{tpu_custom_call.1} parent=0
    #allocation2 [shape = 'u8[8192]{0}', space=vmem, size = 0x2000, scoped, tag = 'input window, operand 0, single buffered']
    #allocation3 [shape = 's32[1]{0}', space=sflag, size = 0x4, scoped, tag = 'scoped memory for tpu_custom_call.1']
    #allocation4 [shape = 's32[1]{0}', space=sflag, size = 0x4, scoped, tag = 'scoped memory for tpu_custom_call.1']
    #allocation5 [shape = 'u8[8192]{0}', space=vmem, size = 0x2000, scoped, tag = 'output window, operand 0, single buffered']
    %7 = vsyncpa [#allocation3], 0
    %8 = vsyncpa [#allocation4], 0
    // Predicated region
    $region2: #{tpu_custom_call.1} parent=1 // pred_check
      _
    $region3: #{tpu_custom_call.1} parent=1 // pred_check_branch
      %10 = sbr.rel (0) target = $region5
    $region4: #{tpu_custom_call.1} parent=1 // pred_region
      %s12 = ssub.s32 256, 256
      %13 = vsyncadd [#allocation3], %s12
      %s14 = sshll.u32 [#allocation2], 4
      %s15 = int_to_ptr.vmem [resolvable:$true] %s14
      %20 = dma.hbm_to_vmem [thread:$0]  %s0, 256, %s15, [#allocation3], 128, 128, 8
    $region5: #{tpu_custom_call.1} parent=1 // pred_fallthru
      _
    // Predicated region
    $region6: #{tpu_custom_call.1} parent=1 // pred_check
      _
    $region7: #{tpu_custom_call.1} parent=1 // pred_check_branch
      %22 = sbr.rel (0) target = $region9
    $region8: #{tpu_custom_call.1} parent=1 // pred_region
      _
    $region9: #{tpu_custom_call.1} parent=1 // pred_fallthru
      _
    // Predicated region
    $region10: #{tpu_custom_call.1} parent=1 // pred_check
      _
    $region11: #{tpu_custom_call.1} parent=1 // pred_check_branch
      %24 = sbr.rel (0) target = $region13
    $region12: #{tpu_custom_call.1} parent=1 // pred_region
      %25 = dma.done [#allocation3], 256
    $region13: #{tpu_custom_call.1} parent=1 // pred_fallthru
      _
    %v26 = vld [vmem:[#allocation2] sm:$0xff]
    %v27 = vld [vmem:[#allocation2 + $0x8] sm:$0xff]
    %v28 = vmul.f32 %v26, %v26
    %v29 = vmul.f32 %v27, %v27
    %30 = vadd.xlane.f32.xlu0 %v28
    %v31 = vpop.xlane.xlu0 %30
    %32 = vadd.xlane.f32.xlu0 %v29
    %v33 = vpop.xlane.xlu0 %32
    %v34 = vmul.f32 %v31, 0.03125
    %v35 = vmul.f32 %v33, 0.03125
    %v36 = vadd.f32 %v34, 1e-05
    %v37 = vadd.f32 %v35, 1e-05
    %v38 = vrsqrt.pop %v36
    %v39 = vrsqrt.pop %v37
    %v40 = vld [vmem:[%s1] sm:$0x1]
    %v42 = vlaneseq
    %v43 = vshrl.u32 %v42, 7
    %v44 = vsub.s32 0, %v43
    %v45 = vrot.slane %v40, %v44
    %v47 = vmul.f32 %v26, %v45
    %v48 = vmul.f32 %v27, %v45
    %v49 = vmul.f32 %v47, %v38
    %v50 = vmul.f32 %v48, %v39
    %51 = vst [vmem:[#allocation5] sm:$0xff] %v49
    %52 = vst [vmem:[#allocation5 + $0x8] sm:$0xff] %v50
    // Predicated region
    $region14: #{tpu_custom_call.1} parent=1 // pred_check
      _
    $region15: #{tpu_custom_call.1} parent=1 // pred_check_branch
      %54 = sbr.rel (0) target = $region17
    $region16: #{tpu_custom_call.1} parent=1 // pred_region
      %s56 = ssub.s32 256, 256
      %57 = vsyncadd [#allocation4], %s56
      %s58 = sshll.u32 [#allocation5], 4
      %s59 = int_to_ptr.vmem [resolvable:$true] %s58
      %64 = dma.vmem_to_hbm [thread:$0]  %s59, 256, %s2, [#allocation4], 128, 128, 8
    $region17: #{tpu_custom_call.1} parent=1 // pred_fallthru
      _
    // Predicated region
    $region18: #{tpu_custom_call.1} parent=1 // pred_check
      _
    $region19: #{tpu_custom_call.1} parent=1 // pred_check_branch
      %66 = sbr.rel (0) target = $region21
    $region20: #{tpu_custom_call.1} parent=1 // pred_region
      %67 = dma.done [#allocation4], 256
    $region21: #{tpu_custom_call.1} parent=1 // pred_fallthru
      _
    %68 = vsyncpa [#allocation3], 1
    %69 = vsyncpa [#allocation4], 1

</llo_original>
